<compile_context>
chip_gen: v7x
topology: tpu7x:2x2x1
jax: 0.10.0
libtpu: 0.0.40
codegen_flags: <defaults>
</compile_context>

<pallas_src>
import functools

import jax
import jax.numpy as jnp
from jax.experimental import pallas as pl
from jax.experimental.pallas import tpu as pltpu

LANE = 128      # lane width (last dim granularity)
SUBLANE = 8     # sublane granularity (second-to-last dim)


def _round_up(x, m):
    return (x + m - 1) // m * m


def mlp_kernel(x_ref, w1_ref, b1_ref, w2_ref, b2_ref, w3_ref, b3_ref, o_ref):
    # One batch tile: (blk, in_p), already bf16.  Weights bf16, biases f32.
    # bf16 operands on the MXU with f32 accumulation; bias/ReLU epilogue f32.
    x = x_ref[...]
    h1 = jnp.dot(x, w1_ref[...], preferred_element_type=jnp.float32) + b1_ref[...]
    h1 = jnp.maximum(h1, 0.0).astype(jnp.bfloat16)          # nonlin = relu
    h2 = jnp.dot(h1, w2_ref[...], preferred_element_type=jnp.float32) + b2_ref[...]
    h2 = jnp.maximum(h2, 0.0).astype(jnp.bfloat16)          # nonlin = relu
    out = jnp.dot(h2, w3_ref[...], preferred_element_type=jnp.float32) + b3_ref[...]
    o_ref[...] = out.astype(o_ref.dtype)


def prepare_params(params):
    """One-time weight prep (do this OUTSIDE the per-step hot path).

    Pads every feature dim to a multiple of 128 lanes (pad columns/rows are
    zero, and zero bias pad + ReLU(0)=0 keeps results exact) and stores the
    weights in bf16.  Returns (prepared_arrays, (in_dim, out_dim))."""
    w1, b1, w2, b2, w3, b3 = params
    in_dim, hid = w1.shape
    out_dim = w3.shape[1]
    in_p = _round_up(in_dim, LANE)
    hid_p = _round_up(hid, LANE)
    out_p = _round_up(out_dim, LANE)

    f32 = jnp.float32
    w1p = jnp.pad(w1, ((0, in_p - in_dim), (0, hid_p - hid))).astype(jnp.bfloat16)
    b1p = jnp.pad(b1.astype(f32).reshape(1, -1), ((0, 0), (0, hid_p - hid)))
    w2p = jnp.pad(w2, ((0, hid_p - hid), (0, hid_p - hid))).astype(jnp.bfloat16)
    b2p = jnp.pad(b2.astype(f32).reshape(1, -1), ((0, 0), (0, hid_p - hid)))
    w3p = jnp.pad(w3, ((0, hid_p - hid), (0, out_p - out_dim))).astype(jnp.bfloat16)
    b3p = jnp.pad(b3.astype(f32).reshape(1, -1), ((0, 0), (0, out_p - out_dim)))
    prepared = (w1p, b1p, w2p, b2p, w3p, b3p)
    return jax.tree_util.tree_map(jax.device_put, prepared), (in_dim, out_dim)


@functools.partial(jax.jit, static_argnames=("out_dim", "block_b", "slice_output"))
def nn_update_forward(x, prepared, *, out_dim, block_b=512, slice_output=True):
    """Fused MLP forward.

    x: (B, input_dim) float32.  `prepared` comes from prepare_params().
    Returns (B, output_dim) float32 (or the lane-padded (B, out_p) array if
    slice_output=False, letting the consumer fuse the column slice)."""
    w1p, b1p, w2p, b2p, w3p, b3p = prepared
    B, in_dim = x.shape
    in_p, hid_p = w1p.shape
    out_p = w3p.shape[1]

    # --- batch tiling (no batch padding: Pallas masks the ragged last tile) --
    blk = min(block_b, _round_up(B, SUBLANE))
    blk = _round_up(blk, SUBLANE)
    # v7x has 2 TensorCores; make sure ("parallel",) has >=2 tiles to shard
    # whenever the batch is big enough that halving the tile still keeps it
    # comfortably above one vreg of sublanes.
    if B >= 128 and pl.cdiv(B, blk) < 2:
        blk = _round_up(pl.cdiv(B, 2), SUBLANE)
    grid_steps = pl.cdiv(B, blk)

    # Hot path only touches x: pad lanes + cast to bf16 (halves x DMA bytes).
    xp = jnp.pad(x, ((0, 0), (0, in_p - in_dim))).astype(jnp.bfloat16)

    # --- VMEM budget (weights single-buffered, x/out tiles double-buffered) --
    need = (
        (in_p * hid_p + hid_p * hid_p + hid_p * out_p) * 2   # bf16 weights x1
        + (2 * hid_p + out_p) * 4                             # f32 biases   x1
        + 2 * blk * in_p * 2                                  # bf16 x tile  x2
        + 2 * blk * out_p * 4                                 # f32 out tile x2
        + 2 * blk * hid_p * (4 + 2)                           # h1/h2 f32+bf16
    )
    vmem_limit = max(32 << 20, min(48 << 20, need + (8 << 20)))
    if need + (4 << 20) > vmem_limit:        # giant configs: never under-budget
        vmem_limit = need + (8 << 20)

    # Cost hint only when there is real per-step work to schedule around.
    if grid_steps > 1:
        flops = 2 * B * (in_p * hid_p + hid_p * hid_p + hid_p * out_p)
        bytes_accessed = (
            B * in_p * 2 + B * out_p * 4                      # x (bf16) in, out (f32)
            + (w1p.size + w2p.size + w3p.size) * 2            # bf16 weights
            + (b1p.size + b2p.size + b3p.size) * 4            # f32 biases
        )
        cost = pl.CostEstimate(flops=flops, transcendentals=0,
                               bytes_accessed=bytes_accessed)
    else:
        cost = None

    # Invariant operands: constant index_map + single buffering (no prefetch
    # needed, half the VMEM).
    inv = dict(pipeline_mode=pl.Buffered(1))

    out_arr = pl.pallas_call(
        mlp_kernel,
        out_shape=jax.ShapeDtypeStruct((B, out_p), jnp.float32),
        grid_spec=pltpu.PrefetchScalarGridSpec(
            num_scalar_prefetch=0,
            grid=(grid_steps,),
            in_specs=[
                pl.BlockSpec((blk, in_p),    lambda i: (i, 0)),         # x (streamed)
                pl.BlockSpec((in_p, hid_p),  lambda i: (0, 0), **inv),  # W1
                pl.BlockSpec((1, hid_p),     lambda i: (0, 0), **inv),  # b1
                pl.BlockSpec((hid_p, hid_p), lambda i: (0, 0), **inv),  # W2
                pl.BlockSpec((1, hid_p),     lambda i: (0, 0), **inv),  # b2
                pl.BlockSpec((hid_p, out_p), lambda i: (0, 0), **inv),  # W3
                pl.BlockSpec((1, out_p),     lambda i: (0, 0), **inv),  # b3
            ],
            out_specs=pl.BlockSpec((blk, out_p), lambda i: (i, 0)),
        ),
        compiler_params=pltpu.CompilerParams(
            dimension_semantics=("parallel",),   # batch tiles shard across cores
            vmem_limit_bytes=int(vmem_limit),
        ),
        cost_estimate=cost,
    )(xp, w1p, b1p, w2p, b2p, w3p, b3p)

    if not slice_output:
        return out_arr            # lane-padded; consumer fuses the column slice
    return out_arr[:, :out_dim]   # rows are already exact (no batch padding)


def init_params(key, input_dim, hidden_dim, output_dim):
    """Deterministic init mimicking nn.Linear's uniform(-1/sqrt(fan_in), ...)."""
    ks = jax.random.split(key, 6)

    def linear(kw, kb, fan_in, fan_out):
        bound = 1.0 / jnp.sqrt(fan_in)
        # stored as (in, out) == PyTorch weight.T
        w = jax.random.uniform(kw, (fan_in, fan_out), jnp.float32, -bound, bound)
        b = jax.random.uniform(kb, (1, fan_out), jnp.float32, -bound, bound)
        return w, b

    w1, b1 = linear(ks[0], ks[1], input_dim, hidden_dim)
    w2, b2 = linear(ks[2], ks[3], hidden_dim, hidden_dim)
    w3, b3 = linear(ks[4], ks[5], hidden_dim, output_dim)
    return (w1, b1, w2, b2, w3, b3)


def reference_forward(x, params):
    w1, b1, w2, b2, w3, b3 = params
    h1 = jnp.maximum(x @ w1 + b1, 0.0)
    h2 = jnp.maximum(h1 @ w2 + b2, 0.0)
    return h2 @ w3 + b3


if __name__ == "__main__":
    key = jax.random.PRNGKey(0)
    k_x, k_p = jax.random.split(key)

    batch, input_dim, hidden_dim, output_dim = 8, 16, 32, 8
    x = jax.random.normal(k_x, (batch, input_dim), jnp.float32)
    params = init_params(k_p, input_dim, hidden_dim, output_dim)

    # One-time weight prep (hoisted out of the hot path).
    prepared, (_, out_dim) = prepare_params(params)

    out = nn_update_forward(x, prepared, out_dim=out_dim)
    out = jax.block_until_ready(out)

    # Second call exercises the cached executable / hot path.
    out = jax.block_until_ready(nn_update_forward(x, prepared, out_dim=out_dim))

    ref = reference_forward(x, params)
    assert out.shape == (batch, output_dim)
    # bf16 matmul operands (f32 accumulation) -> loosened tolerance vs f32 ref.
    assert jnp.allclose(out, ref, atol=5e-2, rtol=5e-2), (
        f"max abs diff {jnp.max(jnp.abs(out - ref))}")

    print("KERNEL_OK")
</pallas_src>

<mosaic_0001>
module attributes {stable_mosaic.version = 11 : i64} {
  func.func @mlp_kernel(%arg0: i32, %arg1: memref<8x128xbf16, #tpu.memory_space<vmem>>, %arg2: memref<128x128xbf16, #tpu.memory_space<vmem>>, %arg3: memref<1x128xf32, #tpu.memory_space<vmem>>, %arg4: memref<128x128xbf16, #tpu.memory_space<vmem>>, %arg5: memref<1x128xf32, #tpu.memory_space<vmem>>, %arg6: memref<128x128xbf16, #tpu.memory_space<vmem>>, %arg7: memref<1x128xf32, #tpu.memory_space<vmem>>, %arg8: memref<8x128xf32, #tpu.memory_space<vmem>>) attributes {dimension_semantics = [#tpu.dimension_semantics<parallel>], iteration_bounds = array<i64: 1>, scalar_prefetch = 0 : i64, scratch_operands = 0 : i64, tpu.core_type = #tpu.core_type<tc>, window_params = [{transform_indices = @transform_0, window_bounds = array<i64: 8, 128>}, {pipeline_mode = #tpu.pipeline_mode<synchronous>, transform_indices = @transform_1, window_bounds = array<i64: 128, 128>}, {pipeline_mode = #tpu.pipeline_mode<synchronous>, transform_indices = @transform_2, window_bounds = array<i64: 1, 128>}, {pipeline_mode = #tpu.pipeline_mode<synchronous>, transform_indices = @transform_3, window_bounds = array<i64: 128, 128>}, {pipeline_mode = #tpu.pipeline_mode<synchronous>, transform_indices = @transform_4, window_bounds = array<i64: 1, 128>}, {pipeline_mode = #tpu.pipeline_mode<synchronous>, transform_indices = @transform_5, window_bounds = array<i64: 128, 128>}, {pipeline_mode = #tpu.pipeline_mode<synchronous>, transform_indices = @transform_6, window_bounds = array<i64: 1, 128>}, {transform_indices = @transform_7, window_bounds = array<i64: 8, 128>}]} {
    %c0 = arith.constant 0 : index
    %c0_0 = arith.constant 0 : index
    %0 = vector.load %arg1[%c0, %c0_0] : memref<8x128xbf16, #tpu.memory_space<vmem>>, vector<8x128xbf16>
    %c0_1 = arith.constant 0 : index
    %c0_2 = arith.constant 0 : index
    %1 = vector.load %arg2[%c0_1, %c0_2] : memref<128x128xbf16, #tpu.memory_space<vmem>>, vector<128x128xbf16>
    %cst = arith.constant dense<0.000000e+00> : vector<8x128xf32>
    %2 = tpu.matmul %0, %1, %cst {dimension_numbers = #tpu.dot_dimension_numbers<[1], [0], [0], [1], [0, 0, 1, 1], [], []>} : vector<8x128xbf16>, vector<128x128xbf16>, vector<8x128xf32> -> vector<8x128xf32>
    %c0_3 = arith.constant 0 : index
    %c0_4 = arith.constant 0 : index
    %3 = vector.load %arg3[%c0_3, %c0_4] : memref<1x128xf32, #tpu.memory_space<vmem>>, vector<1x128xf32>
    %4 = vector.broadcast %3 : vector<1x128xf32> to vector<8x128xf32>
    %5 = arith.addf %2, %4 : vector<8x128xf32>
    %cst_5 = arith.constant 0.000000e+00 : f32
    %6 = vector.broadcast %cst_5 : f32 to vector<8x128xf32>
    %7 = arith.maximumf %5, %6 : vector<8x128xf32>
    %8 = arith.truncf %7 : vector<8x128xf32> to vector<8x128xbf16>
    %c0_6 = arith.constant 0 : index
    %c0_7 = arith.constant 0 : index
    %9 = vector.load %arg4[%c0_6, %c0_7] : memref<128x128xbf16, #tpu.memory_space<vmem>>, vector<128x128xbf16>
    %cst_8 = arith.constant dense<0.000000e+00> : vector<8x128xf32>
    %10 = tpu.matmul %8, %9, %cst_8 {dimension_numbers = #tpu.dot_dimension_numbers<[1], [0], [0], [1], [0, 0, 1, 1], [], []>} : vector<8x128xbf16>, vector<128x128xbf16>, vector<8x128xf32> -> vector<8x128xf32>
    %c0_9 = arith.constant 0 : index
    %c0_10 = arith.constant 0 : index
    %11 = vector.load %arg5[%c0_9, %c0_10] : memref<1x128xf32, #tpu.memory_space<vmem>>, vector<1x128xf32>
    %12 = vector.broadcast %11 : vector<1x128xf32> to vector<8x128xf32>
    %13 = arith.addf %10, %12 : vector<8x128xf32>
    %cst_11 = arith.constant 0.000000e+00 : f32
    %14 = vector.broadcast %cst_11 : f32 to vector<8x128xf32>
    %15 = arith.maximumf %13, %14 : vector<8x128xf32>
    %16 = arith.truncf %15 : vector<8x128xf32> to vector<8x128xbf16>
    %c0_12 = arith.constant 0 : index
    %c0_13 = arith.constant 0 : index
    %17 = vector.load %arg6[%c0_12, %c0_13] : memref<128x128xbf16, #tpu.memory_space<vmem>>, vector<128x128xbf16>
    %cst_14 = arith.constant dense<0.000000e+00> : vector<8x128xf32>
    %18 = tpu.matmul %16, %17, %cst_14 {dimension_numbers = #tpu.dot_dimension_numbers<[1], [0], [0], [1], [0, 0, 1, 1], [], []>} : vector<8x128xbf16>, vector<128x128xbf16>, vector<8x128xf32> -> vector<8x128xf32>
    %c0_15 = arith.constant 0 : index
    %c0_16 = arith.constant 0 : index
    %19 = vector.load %arg7[%c0_15, %c0_16] : memref<1x128xf32, #tpu.memory_space<vmem>>, vector<1x128xf32>
    %20 = vector.broadcast %19 : vector<1x128xf32> to vector<8x128xf32>
    %21 = arith.addf %18, %20 : vector<8x128xf32>
    %c0_17 = arith.constant 0 : index
    %c0_18 = arith.constant 0 : index
    %22 = vector.load %arg8[%c0_17, %c0_18] : memref<8x128xf32, #tpu.memory_space<vmem>>, vector<8x128xf32>
    tpu.vector_store %arg8[%c0_17, %c0_18], %21 {strides = array<i32>} : memref<8x128xf32, #tpu.memory_space<vmem>>, vector<8x128xf32>,
    return
  }
  func.func @transform_0(%arg0: i32) -> (i32, i32) {
    %c0_i32 = arith.constant 0 : i32
    %c0_i32_0 = arith.constant 0 : i32
    return %arg0, %c0_i32 : i32, i32
  }
  func.func @transform_1(%arg0: i32) -> (i32, i32) {
    %c0_i32 = arith.constant 0 : i32
    %c0_i32_0 = arith.constant 0 : i32
    %c0_i32_1 = arith.constant 0 : i32
    return %c0_i32, %c0_i32_0 : i32, i32
  }
  func.func @transform_2(%arg0: i32) -> (i32, i32) {
    %c0_i32 = arith.constant 0 : i32
    %c0_i32_0 = arith.constant 0 : i32
    %c0_i32_1 = arith.constant 0 : i32
    return %c0_i32, %c0_i32_0 : i32, i32
  }
  func.func @transform_3(%arg0: i32) -> (i32, i32) {
    %c0_i32 = arith.constant 0 : i32
    %c0_i32_0 = arith.constant 0 : i32
    %c0_i32_1 = arith.constant 0 : i32
    return %c0_i32, %c0_i32_0 : i32, i32
  }
  func.func @transform_4(%arg0: i32) -> (i32, i32) {
    %c0_i32 = arith.constant 0 : i32
    %c0_i32_0 = arith.constant 0 : i32
    %c0_i32_1 = arith.constant 0 : i32
    return %c0_i32, %c0_i32_0 : i32, i32
  }
  func.func @transform_5(%arg0: i32) -> (i32, i32) {
    %c0_i32 = arith.constant 0 : i32
    %c0_i32_0 = arith.constant 0 : i32
    %c0_i32_1 = arith.constant 0 : i32
    return %c0_i32, %c0_i32_0 : i32, i32
  }
  func.func @transform_6(%arg0: i32) -> (i32, i32) {
    %c0_i32 = arith.constant 0 : i32
    %c0_i32_0 = arith.constant 0 : i32
    %c0_i32_1 = arith.constant 0 : i32
    return %c0_i32, %c0_i32_0 : i32, i32
  }
  func.func @transform_7(%arg0: i32) -> (i32, i32) {
    %c0_i32 = arith.constant 0 : i32
    %c0_i32_0 = arith.constant 0 : i32
    return %arg0, %c0_i32 : i32, i32
  }
}

</mosaic_0001>

<llo_original>
// kernel: nn_update_forward.1
$region0: #{nn_update_forward.1}
  #allocation0 [shape = 'u32[]', space=smem, size = 0x4, offset = 0x4, fixed_abs, tag = 'smem constant byte address 0x4 - core index']
  #allocation1 [shape = 'u32[144,128]{1,0:T(1,128)}', space=vmem, size = 0x12000, scoped, tag = 'internal scratch']
  %s0 = inlined_call_operand.vmem [shape: bf16[8,128], index: 0, kind: input, shape index: {}]
  %s1 = inlined_call_operand.hbm [shape: bf16[128,128], index: 1, kind: input, shape index: {}]
  %s2 = inlined_call_operand.vmem [shape: f32[1,128], index: 2, kind: input, shape index: {}]
  %s3 = inlined_call_operand.hbm [shape: bf16[128,128], index: 3, kind: input, shape index: {}]
  %s4 = inlined_call_operand.vmem [shape: f32[1,128], index: 4, kind: input, shape index: {}]
  %s5 = inlined_call_operand.hbm [shape: bf16[128,128], index: 5, kind: input, shape index: {}]
  %s6 = inlined_call_operand.vmem [shape: f32[1,128], index: 6, kind: input, shape index: {}]
  %s7 = inlined_call_operand.hbm [shape: f32[8,128], index: 7, kind: output, shape index: {}]
  %s8 = sld [smem:[#allocation0]]
  $region50: #{nn_update_forward.1} parent=0
    _
  %s10 = ssub.s32 1, %s8
  %s11 = scalar_select 0, %s10, %s8
  $region1: #{nn_update_forward.1} parent=0
    #allocation2 [shape = 'u8[32768]{0}', space=vmem, size = 0x8000, scoped, tag = 'input window, operand 1, single buffered']
    #allocation3 [shape = 's32[1]{0}', space=sflag, size = 0x4, scoped, tag = 'scoped memory for nn_update_forward.1']
    #allocation4 [shape = 's32[1]{0}', space=sflag, size = 0x4, scoped, tag = 'scoped memory for nn_update_forward.1']
    #allocation5 [shape = 'u8[32768]{0}', space=vmem, size = 0x8000, scoped, tag = 'input window, operand 3, single buffered']
    #allocation6 [shape = 's32[1]{0}', space=sflag, size = 0x4, scoped, tag = 'scoped memory for nn_update_forward.1']
    #allocation7 [shape = 'u8[32768]{0}', space=vmem, size = 0x8000, scoped, tag = 'input window, operand 5, single buffered']
    #allocation8 [shape = 'u8[4096]{0}', space=vmem, size = 0x1000, scoped, tag = 'output window, operand 0, single buffered']
    %12 = vsyncpa [#allocation3], 0
    %13 = vsyncpa [#allocation6], 0
    %14 = vsyncpa [#allocation4], 0
    // Predicated region
    $region2: #{nn_update_forward.1} parent=1 // pred_check
      _
    $region3: #{nn_update_forward.1} parent=1 // pred_check_branch
      %16 = sbr.rel (0) target = $region5
    $region4: #{nn_update_forward.1} parent=1 // pred_region
      _
    $region5: #{nn_update_forward.1} parent=1 // pred_fallthru
      _
    // Predicated region
    $region6: #{nn_update_forward.1} parent=1 // pred_check
      _
    $region7: #{nn_update_forward.1} parent=1 // pred_check_branch
      %18 = sbr.rel (0) target = $region9
    $region8: #{nn_update_forward.1} parent=1 // pred_region
      %s20 = ssub.s32 1024, 1024
      %21 = vsyncadd [#allocation3], %s20
      %s22 = sshll.u32 [#allocation2], 4
      %s23 = int_to_ptr.vmem [resolvable:$true] %s22
      %28 = dma.hbm_to_vmem [thread:$0]  %s1, 1024, %s23, [#allocation3], 64, 64, 4
    $region9: #{nn_update_forward.1} parent=1 // pred_fallthru
      _
    // Predicated region
    $region10: #{nn_update_forward.1} parent=1 // pred_check
      _
    $region11: #{nn_update_forward.1} parent=1 // pred_check_branch
      %30 = sbr.rel (0) target = $region13
    $region12: #{nn_update_forward.1} parent=1 // pred_region
      _
    $region13: #{nn_update_forward.1} parent=1 // pred_fallthru
      _
    // Predicated region
    $region14: #{nn_update_forward.1} parent=1 // pred_check
      _
    $region15: #{nn_update_forward.1} parent=1 // pred_check_branch
      %32 = sbr.rel (0) target = $region17
    $region16: #{nn_update_forward.1} parent=1 // pred_region
      %s34 = ssub.s32 1024, 1024
      %35 = vsyncadd [#allocation6], %s34
      %s36 = sshll.u32 [#allocation5], 4
      %s37 = int_to_ptr.vmem [resolvable:$true] %s36
      %42 = dma.hbm_to_vmem [thread:$0]  %s3, 1024, %s37, [#allocation6], 64, 64, 4
    $region17: #{nn_update_forward.1} parent=1 // pred_fallthru
      _
    // Predicated region
    $region18: #{nn_update_forward.1} parent=1 // pred_check
      _
    $region19: #{nn_update_forward.1} parent=1 // pred_check_branch
      %44 = sbr.rel (0) target = $region21
    $region20: #{nn_update_forward.1} parent=1 // pred_region
      _
    $region21: #{nn_update_forward.1} parent=1 // pred_fallthru
      _
    // Predicated region
    $region22: #{nn_update_forward.1} parent=1 // pred_check
      _
    $region23: #{nn_update_forward.1} parent=1 // pred_check_branch
      %46 = sbr.rel (0) target = $region25
    $region24: #{nn_update_forward.1} parent=1 // pred_region
      %s48 = ssub.s32 1024, 1024
      %49 = vsyncadd [#allocation6], %s48
      %s50 = sshll.u32 [#allocation7], 4
      %s51 = int_to_ptr.vmem [resolvable:$true] %s50
      %56 = dma.hbm_to_vmem [thread:$0]  %s5, 1024, %s51, [#allocation6], 64, 64, 4
    $region25: #{nn_update_forward.1} parent=1 // pred_fallthru
      _
    // Predicated region
    $region26: #{nn_update_forward.1} parent=1 // pred_check
      _
    $region27: #{nn_update_forward.1} parent=1 // pred_check_branch
      %58 = sbr.rel (0) target = $region29
    $region28: #{nn_update_forward.1} parent=1 // pred_region
      _
    $region29: #{nn_update_forward.1} parent=1 // pred_fallthru
      _
    // Predicated region
    $region30: #{nn_update_forward.1} parent=1 // pred_check
      _
    $region31: #{nn_update_forward.1} parent=1 // pred_check_branch
      %60 = sbr.rel (0) target = $region33
    $region32: #{nn_update_forward.1} parent=1 // pred_region
      %61 = dma.done [#allocation3], 1024
    $region33: #{nn_update_forward.1} parent=1 // pred_fallthru
      _
    // Predicated region
    $region34: #{nn_update_forward.1} parent=1 // pred_check
      _
    $region35: #{nn_update_forward.1} parent=1 // pred_check_branch
      %63 = sbr.rel (0) target = $region37
    $region36: #{nn_update_forward.1} parent=1 // pred_region
      %64 = dma.done [#allocation6], 1024
    $region37: #{nn_update_forward.1} parent=1 // pred_fallthru
      _
    // Predicated region
    $region38: #{nn_update_forward.1} parent=1 // pred_check
      _
    $region39: #{nn_update_forward.1} parent=1 // pred_check_branch
      %66 = sbr.rel (0) target = $region41
    $region40: #{nn_update_forward.1} parent=1 // pred_region
      %67 = dma.done [#allocation6], 1024
    $region41: #{nn_update_forward.1} parent=1 // pred_fallthru
      _
    %v69 = vld [vmem:[%s0] sm:$0xf]
    %v70 = vld [vmem:[#allocation2] sm:$0xf]
    %v71 = vld [vmem:[#allocation2 + $0x4] sm:$0xf]
    %v72 = vld [vmem:[#allocation2 + $0x8] sm:$0xf]
    %v73 = vld [vmem:[#allocation2 + $0xc] sm:$0xf]
    %v74 = vld [vmem:[#allocation2 + $0x10] sm:$0xf]
    %v75 = vld [vmem:[#allocation2 + $0x14] sm:$0xf]
    %v76 = vld [vmem:[#allocation2 + $0x18] sm:$0xf]
    %v77 = vld [vmem:[#allocation2 + $0x1c] sm:$0xf]
    %v78 = vld [vmem:[#allocation2 + $0x20] sm:$0xf]
    %v79 = vld [vmem:[#allocation2 + $0x24] sm:$0xf]
    %v80 = vld [vmem:[#allocation2 + $0x28] sm:$0xf]
    %v81 = vld [vmem:[#allocation2 + $0x2c] sm:$0xf]
    %v82 = vld [vmem:[#allocation2 + $0x30] sm:$0xf]
    %v83 = vld [vmem:[#allocation2 + $0x34] sm:$0xf]
    %v84 = vld [vmem:[#allocation2 + $0x38] sm:$0xf]
    %v85 = vld [vmem:[#allocation2 + $0x3c] sm:$0xf]
    %v86 = vld [vmem:[%s2] sm:$0x1]
    %v88 = vlaneseq
    %v89 = vshrl.u32 %v88, 7
    %v90 = vsub.s32 0, %v89
    %v91 = vrot.slane %v86, %v90
    %v109 = vunpack.c.l.b16 %v70
    %v110 = vunpack.c.l.b16 %v71
    %v111 = vunpack.c.l.b16 %v72
    %v112 = vunpack.c.l.b16 %v73
    %v113 = vunpack.c.l.b16 %v74
    %v114 = vunpack.c.l.b16 %v75
    %v115 = vunpack.c.l.b16 %v76
    %v116 = vunpack.c.l.b16 %v77
    %v117 = vunpack.c.l.b16 %v78
    %v118 = vunpack.c.l.b16 %v79
    %v119 = vunpack.c.l.b16 %v80
    %v120 = vunpack.c.l.b16 %v81
    %v121 = vunpack.c.l.b16 %v82
    %v122 = vunpack.c.l.b16 %v83
    %v123 = vunpack.c.l.b16 %v84
    %v124 = vunpack.c.l.b16 %v85
    %v125 = vpack.c.b16 %v110, %v109
    %v126 = vpack.c.b16 %v112, %v111
    %v127 = vpack.c.b16 %v114, %v113
    %v128 = vpack.c.b16 %v116, %v115
    %v129 = vpack.c.b16 %v118, %v117
    %v130 = vpack.c.b16 %v120, %v119
    %v131 = vpack.c.b16 %v122, %v121
    %v132 = vpack.c.b16 %v124, %v123
    %141 = vmatprep.subr.bf16.mxu0 0
    %142 = vmatpush1.bf16.msra.mxu0 %v125
    %143 = vmatprep.subr.bf16.mxu0 0
    %144 = vmatpush1.bf16.msra.mxu0 %v126
    %145 = vmatprep.subr.bf16.mxu0 0
    %146 = vmatpush1.bf16.msra.mxu0 %v127
    %147 = vmatprep.subr.bf16.mxu0 0
    %148 = vmatpush1.bf16.msra.mxu0 %v128
    %149 = vmatprep.subr.bf16.mxu0 0
    %150 = vmatpush1.bf16.msra.mxu0 %v129
    %151 = vmatprep.subr.bf16.mxu0 0
    %152 = vmatpush1.bf16.msra.mxu0 %v130
    %153 = vmatprep.subr.bf16.mxu0 0
    %154 = vmatpush1.bf16.msra.mxu0 %v131
    %155 = vmatprep.subr.bf16.mxu0 0
    %156 = vmatpush1.bf16.msra.mxu0 %v132
    %157 = vmatprep.subr.bf16.mxu0 0
    %158 = vmatpush1.bf16.msra.mxu0 0
    %159 = vmatprep.subr.bf16.mxu0 0
    %160 = vmatpush1.bf16.msra.mxu0 0
    %161 = vmatprep.subr.bf16.mxu0 0
    %162 = vmatpush1.bf16.msra.mxu0 0
    %163 = vmatprep.subr.bf16.mxu0 0
    %164 = vmatpush1.bf16.msra.mxu0 0
    %165 = vmatprep.subr.bf16.mxu0 0
    %166 = vmatpush1.bf16.msra.mxu0 0
    %167 = vmatprep.subr.bf16.mxu0 0
    %168 = vmatpush1.bf16.msra.mxu0 0
    %169 = vmatprep.subr.bf16.mxu0 0
    %170 = vmatpush1.bf16.msra.mxu0 0
    %171 = vmatprep.subr.bf16.mxu0 0
    %172 = vmatpush1.bf16.msra.mxu0 0
    %173 = vmatprep.mubr.bf16.mxu0 0
    %174 = vmatmul.mubr.bf16.gmra.mrb[0].mxu0 %v69
    %v175 = vpop.f32.mrb[0].mxu0
    %v176 = vadd.f32 %v91, %v175
    %v177 = vpop.f32.mrb[0].mxu0
    %v178 = vpop.f32.mrb[0].mxu0
    %v179 = vpop.f32.mrb[0].mxu0
    %180 = vdwg.mxu0
    %v181 = vmax.f32 %v176, 0.0
    %v182 = vpack.c.bf16 %v181, %v181
    %v183 = vld [vmem:[#allocation5] sm:$0xf]
    %v184 = vld [vmem:[#allocation5 + $0x4] sm:$0xf]
    %v185 = vld [vmem:[#allocation5 + $0x8] sm:$0xf]
    %v186 = vld [vmem:[#allocation5 + $0xc] sm:$0xf]
    %v187 = vld [vmem:[#allocation5 + $0x10] sm:$0xf]
    %v188 = vld [vmem:[#allocation5 + $0x14] sm:$0xf]
    %v189 = vld [vmem:[#allocation5 + $0x18] sm:$0xf]
    %v190 = vld [vmem:[#allocation5 + $0x1c] sm:$0xf]
    %v191 = vld [vmem:[#allocation5 + $0x20] sm:$0xf]
    %v192 = vld [vmem:[#allocation5 + $0x24] sm:$0xf]
    %v193 = vld [vmem:[#allocation5 + $0x28] sm:$0xf]
    %v194 = vld [vmem:[#allocation5 + $0x2c] sm:$0xf]
    %v195 = vld [vmem:[#allocation5 + $0x30] sm:$0xf]
    %v196 = vld [vmem:[#allocation5 + $0x34] sm:$0xf]
    %v197 = vld [vmem:[#allocation5 + $0x38] sm:$0xf]
    %v198 = vld [vmem:[#allocation5 + $0x3c] sm:$0xf]
    %v199 = vld [vmem:[%s4] sm:$0x1]
    %v201 = vlaneseq
    %v202 = vshrl.u32 %v201, 7
    %v203 = vsub.s32 0, %v202
    %v204 = vrot.slane %v199, %v203
    %v222 = vunpack.c.l.b16 %v183
    %v223 = vunpack.c.l.b16 %v184
    %v224 = vunpack.c.l.b16 %v185
    %v225 = vunpack.c.l.b16 %v186
    %v226 = vunpack.c.l.b16 %v187
    %v227 = vunpack.c.l.b16 %v188
    %v228 = vunpack.c.l.b16 %v189
    %v229 = vunpack.c.l.b16 %v190
    %v230 = vunpack.c.l.b16 %v191
    %v231 = vunpack.c.l.b16 %v192
    %v232 = vunpack.c.l.b16 %v193
    %v233 = vunpack.c.l.b16 %v194
    %v234 = vunpack.c.l.b16 %v195
    %v235 = vunpack.c.l.b16 %v196
    %v236 = vunpack.c.l.b16 %v197
    %v237 = vunpack.c.l.b16 %v198
    %v238 = vpack.c.b16 %v223, %v222
    %v239 = vpack.c.b16 %v225, %v224
    %v240 = vpack.c.b16 %v227, %v226
    %v241 = vpack.c.b16 %v229, %v228
    %v242 = vpack.c.b16 %v231, %v230
    %v243 = vpack.c.b16 %v233, %v232
    %v244 = vpack.c.b16 %v235, %v234
    %v245 = vpack.c.b16 %v237, %v236
    %254 = vmatprep.subr.bf16.mxu0 0
    %255 = vmatpush1.bf16.msra.mxu0 %v238
    %256 = vmatprep.subr.bf16.mxu0 0
    %257 = vmatpush1.bf16.msra.mxu0 %v239
    %258 = vmatprep.subr.bf16.mxu0 0
    %259 = vmatpush1.bf16.msra.mxu0 %v240
    %260 = vmatprep.subr.bf16.mxu0 0
    %261 = vmatpush1.bf16.msra.mxu0 %v241
    %262 = vmatprep.subr.bf16.mxu0 0
    %263 = vmatpush1.bf16.msra.mxu0 %v242
    %264 = vmatprep.subr.bf16.mxu0 0
    %265 = vmatpush1.bf16.msra.mxu0 %v243
    %266 = vmatprep.subr.bf16.mxu0 0
    %267 = vmatpush1.bf16.msra.mxu0 %v244
    %268 = vmatprep.subr.bf16.mxu0 0
    %269 = vmatpush1.bf16.msra.mxu0 %v245
    %270 = vmatprep.subr.bf16.mxu0 0
    %271 = vmatpush1.bf16.msra.mxu0 0
    %272 = vmatprep.subr.bf16.mxu0 0
    %273 = vmatpush1.bf16.msra.mxu0 0
    %274 = vmatprep.subr.bf16.mxu0 0
    %275 = vmatpush1.bf16.msra.mxu0 0
    %276 = vmatprep.subr.bf16.mxu0 0
    %277 = vmatpush1.bf16.msra.mxu0 0
    %278 = vmatprep.subr.bf16.mxu0 0
    %279 = vmatpush1.bf16.msra.mxu0 0
    %280 = vmatprep.subr.bf16.mxu0 0
    %281 = vmatpush1.bf16.msra.mxu0 0
    %282 = vmatprep.subr.bf16.mxu0 0
    %283 = vmatpush1.bf16.msra.mxu0 0
    %284 = vmatprep.subr.bf16.mxu0 0
    %285 = vmatpush1.bf16.msra.mxu0 0
    %286 = vmatprep.mubr.bf16.mxu0 0
    %287 = vmatmul.mubr.bf16.gmra.mrb[0].mxu0 %v182
    %v288 = vpop.f32.mrb[0].mxu0
    %v289 = vadd.f32 %v204, %v288
    %v290 = vpop.f32.mrb[0].mxu0
    %v291 = vpop.f32.mrb[0].mxu0
    %v292 = vpop.f32.mrb[0].mxu0
    %293 = vdwg.mxu0
    %v294 = vmax.f32 %v289, 0.0
    %v295 = vpack.c.bf16 %v294, %v294
    %v296 = vld [vmem:[#allocation7] sm:$0xf]
    %v297 = vld [vmem:[#allocation7 + $0x4] sm:$0xf]
    %v298 = vld [vmem:[#allocation7 + $0x8] sm:$0xf]
    %v299 = vld [vmem:[#allocation7 + $0xc] sm:$0xf]
    %v300 = vld [vmem:[#allocation7 + $0x10] sm:$0xf]
    %v301 = vld [vmem:[#allocation7 + $0x14] sm:$0xf]
    %v302 = vld [vmem:[#allocation7 + $0x18] sm:$0xf]
    %v303 = vld [vmem:[#allocation7 + $0x1c] sm:$0xf]
    %v304 = vld [vmem:[#allocation7 + $0x20] sm:$0xf]
    %v305 = vld [vmem:[#allocation7 + $0x24] sm:$0xf]
    %v306 = vld [vmem:[#allocation7 + $0x28] sm:$0xf]
    %v307 = vld [vmem:[#allocation7 + $0x2c] sm:$0xf]
    %v308 = vld [vmem:[#allocation7 + $0x30] sm:$0xf]
    %v309 = vld [vmem:[#allocation7 + $0x34] sm:$0xf]
    %v310 = vld [vmem:[#allocation7 + $0x38] sm:$0xf]
    %v311 = vld [vmem:[#allocation7 + $0x3c] sm:$0xf]
    %v312 = vld [vmem:[%s6] sm:$0x1]
    %v314 = vlaneseq
    %v315 = vshrl.u32 %v314, 7
    %v316 = vsub.s32 0, %v315
    %v317 = vrot.slane %v312, %v316
    %v335 = vunpack.c.l.b16 %v296
    %v336 = vunpack.c.l.b16 %v297
    %v337 = vunpack.c.l.b16 %v298
    %v338 = vunpack.c.l.b16 %v299
    %v339 = vunpack.c.l.b16 %v300
    %v340 = vunpack.c.l.b16 %v301
    %v341 = vunpack.c.l.b16 %v302
    %v342 = vunpack.c.l.b16 %v303
    %v343 = vunpack.c.l.b16 %v304
    %v344 = vunpack.c.l.b16 %v305
    %v345 = vunpack.c.l.b16 %v306
    %v346 = vunpack.c.l.b16 %v307
    %v347 = vunpack.c.l.b16 %v308
    %v348 = vunpack.c.l.b16 %v309
    %v349 = vunpack.c.l.b16 %v310
    %v350 = vunpack.c.l.b16 %v311
    %v351 = vpack.c.b16 %v336, %v335
    %v352 = vpack.c.b16 %v338, %v337
    %v353 = vpack.c.b16 %v340, %v339
    %v354 = vpack.c.b16 %v342, %v341
    %v355 = vpack.c.b16 %v344, %v343
    %v356 = vpack.c.b16 %v346, %v345
    %v357 = vpack.c.b16 %v348, %v347
    %v358 = vpack.c.b16 %v350, %v349
    %367 = vmatprep.subr.bf16.mxu0 0
    %368 = vmatpush1.bf16.msra.mxu0 %v351
    %369 = vmatprep.subr.bf16.mxu0 0
    %370 = vmatpush1.bf16.msra.mxu0 %v352
    %371 = vmatprep.subr.bf16.mxu0 0
    %372 = vmatpush1.bf16.msra.mxu0 %v353
    %373 = vmatprep.subr.bf16.mxu0 0
    %374 = vmatpush1.bf16.msra.mxu0 %v354
    %375 = vmatprep.subr.bf16.mxu0 0
    %376 = vmatpush1.bf16.msra.mxu0 %v355
    %377 = vmatprep.subr.bf16.mxu0 0
    %378 = vmatpush1.bf16.msra.mxu0 %v356
    %379 = vmatprep.subr.bf16.mxu0 0
    %380 = vmatpush1.bf16.msra.mxu0 %v357
    %381 = vmatprep.subr.bf16.mxu0 0
    %382 = vmatpush1.bf16.msra.mxu0 %v358
    %383 = vmatprep.subr.bf16.mxu0 0
    %384 = vmatpush1.bf16.msra.mxu0 0
    %385 = vmatprep.subr.bf16.mxu0 0
    %386 = vmatpush1.bf16.msra.mxu0 0
    %387 = vmatprep.subr.bf16.mxu0 0
    %388 = vmatpush1.bf16.msra.mxu0 0
    %389 = vmatprep.subr.bf16.mxu0 0
    %390 = vmatpush1.bf16.msra.mxu0 0
    %391 = vmatprep.subr.bf16.mxu0 0
    %392 = vmatpush1.bf16.msra.mxu0 0
    %393 = vmatprep.subr.bf16.mxu0 0
    %394 = vmatpush1.bf16.msra.mxu0 0
    %395 = vmatprep.subr.bf16.mxu0 0
    %396 = vmatpush1.bf16.msra.mxu0 0
    %397 = vmatprep.subr.bf16.mxu0 0
    %398 = vmatpush1.bf16.msra.mxu0 0
    %399 = vmatprep.mubr.bf16.mxu0 0
    %400 = vmatmul.mubr.bf16.gmra.mrb[0].mxu0 %v295
    %v401 = vpop.f32.mrb[0].mxu0
    %v402 = vadd.f32 %v317, %v401
    %v403 = vpop.f32.mrb[0].mxu0
    %v404 = vpop.f32.mrb[0].mxu0
    %v405 = vpop.f32.mrb[0].mxu0
    %406 = vdwg.mxu0
    %407 = vst [vmem:[#allocation8] sm:$0xff] %v402
    // Predicated region
    $region42: #{nn_update_forward.1} parent=1 // pred_check
      _
    $region43: #{nn_update_forward.1} parent=1 // pred_check_branch
      %409 = sbr.rel (0) target = $region45
    $region44: #{nn_update_forward.1} parent=1 // pred_region
      %s411 = ssub.s32 128, 128
      %412 = vsyncadd [#allocation4], %s411
      %s414 = sshll.u32 [#allocation8], 4
      %s415 = int_to_ptr.vmem [resolvable:$true] %s414
      %417 = dma.vmem_to_hbm [thread:$0]  %s415, 128, %s7, [#allocation4]
    $region45: #{nn_update_forward.1} parent=1 // pred_fallthru
      _
    // Predicated region
    $region46: #{nn_update_forward.1} parent=1 // pred_check
      _
    $region47: #{nn_update_forward.1} parent=1 // pred_check_branch
      %419 = sbr.rel (0) target = $region49
    $region48: #{nn_update_forward.1} parent=1 // pred_region
      %420 = dma.done [#allocation4], 128
    $region49: #{nn_update_forward.1} parent=1 // pred_fallthru
      _
    %421 = vsyncpa [#allocation3], 1
    %422 = vsyncpa [#allocation6], 1
    %423 = vsyncpa [#allocation4], 1

</llo_original>
